<compile_context>
chip_gen: v7x
topology: tpu7x:2x2x1
jax: 0.10.0
libtpu: 0.0.40
codegen_flags: <defaults>
</compile_context>

<pallas_src>
import functools

import jax
import jax.numpy as jnp
from jax.experimental import pallas as pl
from jax.experimental.pallas import tpu as pltpu


def _round_up(x, m):
    return ((x + m - 1) // m) * m


def _fused_layer_kernel(wu_ref, wo_ref, x_ref, under_ref, over_ref):
    """Two small MXU dots per coefficient tile.

    wu_ref : (L, Kp)   under combination  [wneg | wpos | bias | 0-pad]
    wo_ref : (L, Kp)   over  combination  [wpos | wneg | bias | 0-pad]
    x_ref  : (Kp, TN)  pre-stacked [OVER ; UNDER ; ones ; 0-pad] coefficient tile
    under_ref, over_ref : (L, TN)  lane-dense stores
    """
    x = x_ref[...]
    under_ref[...] = jnp.dot(wu_ref[...], x, preferred_element_type=jnp.float32)
    over_ref[...] = jnp.dot(wo_ref[...], x, preferred_element_type=jnp.float32)


@functools.partial(jax.jit, static_argnames=("small_fastpath_bytes",))
def layer_module_forward(layer_weights, layer_biases,
                         inputs_under, inputs_over,
                         under_degrees, over_degrees,
                         small_fastpath_bytes: int = 1 << 20):
    """LayerModule.forward for activation='linear', rank=0, size=1.

    inputs_under / inputs_over: (I, n_vars, T) stacked polynomial blocks.
    Returns stacked (L, n_vars, T) under/over polynomials and stacked
    (L, n_vars) under/over degrees.
    """
    L, I = layer_weights.shape
    _, V, T = inputs_under.shape
    VT = V * T

    w = layer_weights.astype(jnp.float32)
    b = layer_biases.reshape(L, 1).astype(jnp.float32)
    wpos = jnp.maximum(w, 0.0)
    wneg = jnp.minimum(w, 0.0)

    # Contraction dim = [over | under | bias] padded up to whole sublane rows.
    K = 2 * I + 1
    Kp = _round_up(K, 8)
    wz = jnp.zeros((L, Kp - K), jnp.float32)
    wu = jnp.concatenate([wneg, wpos, b, wz], axis=1)   # (L, Kp): wneg@O + wpos@U + b
    wo = jnp.concatenate([wpos, wneg, b, wz], axis=1)   # (L, Kp): wpos@O + wneg@U + b

    # Pre-stacked X (single input, single BlockSpec, bias folded via ones row).
    o_flat = inputs_over.reshape(I, VT).astype(jnp.float32)
    u_flat = inputs_under.reshape(I, VT).astype(jnp.float32)
    x = jnp.concatenate(
        [o_flat, u_flat,
         jnp.ones((1, VT), jnp.float32),
         jnp.zeros((Kp - K, VT), jnp.float32)], axis=0)          # (Kp, VT)

    if 4 * (Kp + 2 * L) * VT <= small_fastpath_bytes:
        # Small-problem fast path: a single XLA dot beats pallas launch cost.
        under_flat = wu @ x
        over_flat = wo @ x
    else:
        # Generation-aware VMEM budget -> lane-tile width TN (multiple of 128).
        try:
            vmem_cap = int(pltpu.get_tpu_info().vmem_capacity_bytes)
        except Exception:
            vmem_cap = 64 * 2 ** 20
        vmem_limit = max(16 * 2 ** 20, min(int(0.70 * vmem_cap), 100 * 2 ** 20))

        # Double-buffered per-lane bytes: X tile + two output tiles (weights tiny).
        bytes_per_lane = 2 * 4 * (Kp + 2 * L)
        budget = int(0.6 * vmem_limit)
        tn = max(128, (budget // bytes_per_lane) // 128 * 128)
        tn = min(tn, 16384)
        if VT > 128:
            # Keep >= 2 grid iterations so the parallel axis can shard across
            # the two v7x TensorCores (negligible cost on single-TC v5e/v6e).
            tn = min(tn, _round_up(pl.cdiv(VT, 2), 128))
        tn = min(tn, _round_up(VT, 128))

        grid = (pl.cdiv(VT, tn),)   # partial last block masked by Pallas

        under_flat, over_flat = pl.pallas_call(
            _fused_layer_kernel,
            out_shape=(jax.ShapeDtypeStruct((L, VT), jnp.float32),
                       jax.ShapeDtypeStruct((L, VT), jnp.float32)),
            grid=grid,
            in_specs=[
                pl.BlockSpec((L, Kp), lambda n: (0, 0)),    # under weights (replicated)
                pl.BlockSpec((L, Kp), lambda n: (0, 0)),    # over weights (replicated)
                pl.BlockSpec((Kp, tn), lambda n: (0, n)),   # stacked X tile
            ],
            out_specs=(pl.BlockSpec((L, tn), lambda n: (0, n)),
                       pl.BlockSpec((L, tn), lambda n: (0, n))),
            compiler_params=pltpu.CompilerParams(
                dimension_semantics=("parallel",),
                vmem_limit_bytes=vmem_limit),
        )(wu, wo, x)

    under = under_flat.reshape(L, V, T)
    over = over_flat.reshape(L, V, T)

    # Degree propagation: per node, elementwise max over contributing inputs
    # (inputs whose weight is non-zero).  Trivial O(L*I*V) -> plain JAX.
    ud = under_degrees.astype(jnp.float32)
    od = over_degrees.astype(jnp.float32)
    mpos = w > 0.0
    mneg = w < 0.0

    def masked_max(mask, deg):
        # (L, I, 1) select (1, I, V) -> max over I -> (L, V); degrees are >= 0,
        # so non-contributing inputs (masked to 0) never raise the max, and an
        # all-zero-weight node gets degree 0 (matches the reference empty case).
        return jnp.max(jnp.where(mask[:, :, None], deg[None, :, :], 0.0), axis=1)

    under_deg = jnp.maximum(masked_max(mneg, od), masked_max(mpos, ud))
    over_deg = jnp.maximum(masked_max(mpos, od), masked_max(mneg, ud))
    return under, over, under_deg, over_deg


if __name__ == "__main__":
    key = jax.random.PRNGKey(0)
    n_inputs = 8       # width of the previous layer (number of input polynomials)
    layer_size = 8     # number of nodes in this layer
    n_vars = 4         # number of input variables
    T = 100            # coefficients per variable row (VT=400: exercises
                       # multi-step grid + masked partial last block)

    k1, k2, k3, k4, k5, k6 = jax.random.split(key, 6)
    layer_weights = jax.random.normal(k1, (layer_size, n_inputs), dtype=jnp.float32)
    layer_biases = jax.random.normal(k2, (layer_size,), dtype=jnp.float32)
    inputs_under = jax.random.normal(k3, (n_inputs, n_vars, T), dtype=jnp.float32)
    inputs_over = inputs_under + 0.1 * jnp.abs(
        jax.random.normal(k4, (n_inputs, n_vars, T), dtype=jnp.float32))
    under_degrees = jax.random.randint(k5, (n_inputs, n_vars), 0, 4).astype(jnp.float32)
    over_degrees = jax.random.randint(k6, (n_inputs, n_vars), 0, 4).astype(jnp.float32)

    # small_fastpath_bytes=0 forces the Pallas kernel path even at demo size.
    under, over, udeg, odeg = layer_module_forward(
        layer_weights, layer_biases, inputs_under, inputs_over,
        under_degrees, over_degrees, small_fastpath_bytes=0)
    jax.block_until_ready((under, over, udeg, odeg))

    # Plain-JAX reference check of the fused kernel math.
    wpos = jnp.maximum(layer_weights, 0.0)
    wneg = jnp.minimum(layer_weights, 0.0)
    uf = inputs_under.reshape(n_inputs, -1)
    of = inputs_over.reshape(n_inputs, -1)
    ref_under = wneg @ of + wpos @ uf + layer_biases[:, None]
    ref_over = wpos @ of + wneg @ uf + layer_biases[:, None]
    assert jnp.allclose(under.reshape(layer_size, -1), ref_under, atol=1e-4, rtol=1e-4)
    assert jnp.allclose(over.reshape(layer_size, -1), ref_over, atol=1e-4, rtol=1e-4)

    mpos_m = layer_weights > 0.0
    mneg_m = layer_weights < 0.0
    mm = lambda m, d: jnp.max(jnp.where(m[:, :, None], d[None, :, :], 0.0), axis=1)
    assert jnp.allclose(udeg, jnp.maximum(mm(mneg_m, over_degrees), mm(mpos_m, under_degrees)))
    assert jnp.allclose(odeg, jnp.maximum(mm(mpos_m, over_degrees), mm(mneg_m, under_degrees)))

    print("KERNEL_OK")
</pallas_src>

<mosaic_0001>
module attributes {stable_mosaic.version = 11 : i64} {
  func.func @_fused_layer_kernel(%arg0: i32, %arg1: memref<8x24xf32, #tpu.memory_space<vmem>>, %arg2: memref<8x24xf32, #tpu.memory_space<vmem>>, %arg3: memref<24x256xf32, #tpu.memory_space<vmem>>, %arg4: memref<8x256xf32, #tpu.memory_space<vmem>>, %arg5: memref<8x256xf32, #tpu.memory_space<vmem>>) attributes {dimension_semantics = [#tpu.dimension_semantics<parallel>], iteration_bounds = array<i64: 2>, scalar_prefetch = 0 : i64, scratch_operands = 0 : i64, tpu.core_type = #tpu.core_type<tc>, window_params = [{pipeline_mode = #tpu.pipeline_mode<synchronous>, transform_indices = @transform_0, window_bounds = array<i64: 8, 24>}, {pipeline_mode = #tpu.pipeline_mode<synchronous>, transform_indices = @transform_1, window_bounds = array<i64: 8, 24>}, {transform_indices = @transform_2, window_bounds = array<i64: 24, 256>}, {transform_indices = @transform_3, window_bounds = array<i64: 8, 256>}, {transform_indices = @transform_4, window_bounds = array<i64: 8, 256>}]} {
    %c0 = arith.constant 0 : index
    %c0_0 = arith.constant 0 : index
    %0 = vector.load %arg3[%c0, %c0_0] : memref<24x256xf32, #tpu.memory_space<vmem>>, vector<24x256xf32>
    %c0_1 = arith.constant 0 : index
    %c0_2 = arith.constant 0 : index
    %1 = vector.load %arg1[%c0_1, %c0_2] : memref<8x24xf32, #tpu.memory_space<vmem>>, vector<8x24xf32>
    %cst = arith.constant dense<0.000000e+00> : vector<8x256xf32>
    %2 = tpu.matmul %1, %0, %cst {dimension_numbers = #tpu.dot_dimension_numbers<[1], [0], [0], [1], [0, 0, 1, 1], [], []>} : vector<8x24xf32>, vector<24x256xf32>, vector<8x256xf32> -> vector<8x256xf32>
    %c0_3 = arith.constant 0 : index
    %c0_4 = arith.constant 0 : index
    %3 = vector.load %arg4[%c0_3, %c0_4] : memref<8x256xf32, #tpu.memory_space<vmem>>, vector<8x256xf32>
    tpu.vector_store %arg4[%c0_3, %c0_4], %2 {strides = array<i32>} : memref<8x256xf32, #tpu.memory_space<vmem>>, vector<8x256xf32>,
    %c0_5 = arith.constant 0 : index
    %c0_6 = arith.constant 0 : index
    %4 = vector.load %arg2[%c0_5, %c0_6] : memref<8x24xf32, #tpu.memory_space<vmem>>, vector<8x24xf32>
    %cst_7 = arith.constant dense<0.000000e+00> : vector<8x256xf32>
    %5 = tpu.matmul %4, %0, %cst_7 {dimension_numbers = #tpu.dot_dimension_numbers<[1], [0], [0], [1], [0, 0, 1, 1], [], []>} : vector<8x24xf32>, vector<24x256xf32>, vector<8x256xf32> -> vector<8x256xf32>
    %c0_8 = arith.constant 0 : index
    %c0_9 = arith.constant 0 : index
    %6 = vector.load %arg5[%c0_8, %c0_9] : memref<8x256xf32, #tpu.memory_space<vmem>>, vector<8x256xf32>
    tpu.vector_store %arg5[%c0_8, %c0_9], %5 {strides = array<i32>} : memref<8x256xf32, #tpu.memory_space<vmem>>, vector<8x256xf32>,
    return
  }
  func.func @transform_0(%arg0: i32) -> (i32, i32) {
    %c0_i32 = arith.constant 0 : i32
    %c0_i32_0 = arith.constant 0 : i32
    %c0_i32_1 = arith.constant 0 : i32
    return %c0_i32, %c0_i32_0 : i32, i32
  }
  func.func @transform_1(%arg0: i32) -> (i32, i32) {
    %c0_i32 = arith.constant 0 : i32
    %c0_i32_0 = arith.constant 0 : i32
    %c0_i32_1 = arith.constant 0 : i32
    return %c0_i32, %c0_i32_0 : i32, i32
  }
  func.func @transform_2(%arg0: i32) -> (i32, i32) {
    %c0_i32 = arith.constant 0 : i32
    %c0_i32_0 = arith.constant 0 : i32
    return %c0_i32, %arg0 : i32, i32
  }
  func.func @transform_3(%arg0: i32) -> (i32, i32) {
    %c0_i32 = arith.constant 0 : i32
    %c0_i32_0 = arith.constant 0 : i32
    return %c0_i32, %arg0 : i32, i32
  }
  func.func @transform_4(%arg0: i32) -> (i32, i32) {
    %c0_i32 = arith.constant 0 : i32
    %c0_i32_0 = arith.constant 0 : i32
    return %c0_i32, %arg0 : i32, i32
  }
}

</mosaic_0001>

<llo_original>
// kernel: layer_module_forward.1
$region0: #{layer_module_forward.1}
  #allocation0 [shape = 'u32[]', space=smem, size = 0x4, offset = 0x4, fixed_abs, tag = 'smem constant byte address 0x4 - core index']
  #allocation1 [shape = 'u32[144,128]{1,0:T(1,128)}', space=vmem, size = 0x12000, scoped, tag = 'internal scratch']
  %s0 = inlined_call_operand.vmem [shape: f32[8,24], index: 0, kind: input, shape index: {}]
  %s1 = inlined_call_operand.vmem [shape: f32[8,24], index: 1, kind: input, shape index: {}]
  %s2 = inlined_call_operand.vmem [shape: f32[24,400], index: 2, kind: input, shape index: {}]
  %s3 = inlined_call_operand.vmem [shape: f32[8,400], index: 3, kind: output, shape index: {0}]
  %s4 = inlined_call_operand.vmem [shape: f32[8,400], index: 4, kind: output, shape index: {1}]
  %5 = xla_tuple %s3, %s4
  %s6 = sld [smem:[#allocation0]]
  $region76: #{layer_module_forward.1} parent=0
    _
  %s8 = ssub.s32 1, %s6
  %s9 = scalar_select 0, %s8, %s6
  $region1: #{layer_module_forward.1} parent=0
    #allocation2 [shape = 'u8[49152]{0}', space=vmem, size = 0xc000, scoped, tag = 'input window, operand 2']
    loop: start=0, step=1, limit=4
    $region2: #{layer_module_forward.1} parent=1 // loop_pre_header
      _
    $region3: #{layer_module_forward.1} parent=1 // loop_header
      %s11 = sphi 0, %s15
      %p12 = scmp.ge.s32.totalorder %s11, 4
      %s19 = sphi 0, %s19
      %s21 = sphi 0, %s19
      %s22 = sphi 0, %s21
      %s36 = sphi 0, %s22
      %s40 = sphi 0, %s40
      %s42 = sphi 0, %s40
      %s43 = sphi 0, %s42
      %s57 = sphi 0, %s43
      %s63 = sphi 0, %s65
      %s66 = sphi 0, %s63
      %s67 = sphi 0, %s66
      %s83 = sphi 0, %s67
      %s89 = sphi 0, %s91
      %s92 = sphi 0, %s89
      %s93 = sphi 0, %s92
      %s109 = sphi 0, %s93
      %s115 = sphi 0, %s117
      %s118 = sphi 0, %s115
      %s119 = sphi 0, %s118
      %s135 = sphi 0, %s119
    $region4: #{layer_module_forward.1} parent=1 // loop_header_branch
      %14 = sbr.rel (%p12) target = $region8
    $region5: #{layer_module_forward.1} parent=1 // loop_body
      %s16 = ssub.s32 %s11, 1
      %s17 = ssub.s32 %s11, 2
      %s18 = sadd.s32 %s11, 1
      %s20 = sadd.s32 %s19, 1
      %p23 = scmp.eq.s32.totalorder %s11, 1
      %p24 = scmp.ne.s32.totalorder %s19, %s21
      %p25 = scmp.eq.s32.totalorder %s11, 0
      %p26 = por %p24, %p25
      %p27 = scmp.ne.s32.totalorder %s19, %s21
      %p28 = scmp.eq.s32.totalorder %s16, 1
      %p29 = por %p27, %p28
      %p30 = scmp.ne.s32.totalorder %s21, %s22
      %p31 = scmp.eq.s32.totalorder %s16, 0
      %p32 = por %p30, %p31
      %p33 = scmp.ne.s32.totalorder %s21, %s22
      %p34 = scmp.eq.s32.totalorder %s17, 1
      %p35 = por %p33, %p34
      %p37 = scmp.ne.s32.totalorder %s22, %s36
      %p38 = scmp.eq.s32.totalorder %s17, 0
      %p39 = por %p37, %p38
      %s41 = sadd.s32 %s40, 1
      %p44 = scmp.eq.s32.totalorder %s11, 1
      %p45 = scmp.ne.s32.totalorder %s40, %s42
      %p46 = scmp.eq.s32.totalorder %s11, 0
      %p47 = por %p45, %p46
      %p48 = scmp.ne.s32.totalorder %s40, %s42
      %p49 = scmp.eq.s32.totalorder %s16, 1
      %p50 = por %p48, %p49
      %p51 = scmp.ne.s32.totalorder %s42, %s43
      %p52 = scmp.eq.s32.totalorder %s16, 0
      %p53 = por %p51, %p52
      %p54 = scmp.ne.s32.totalorder %s42, %s43
      %p55 = scmp.eq.s32.totalorder %s17, 1
      %p56 = por %p54, %p55
      %p58 = scmp.ne.s32.totalorder %s43, %s57
      %p59 = scmp.eq.s32.totalorder %s17, 0
      %p60 = por %p58, %p59
      %s61 = ssub.s32 %s11, %s18
      %p62 = scmp.eq.s32.totalorder %s61, 0
      %s64 = sadd.s32 %s63, 1
      %s65 = scalar_select %p62, %s63, %s64
      %p68 = pneg %p62
      %p69 = scmp.eq.s32.totalorder %s11, 1
      %p70 = por %p68, %p69
      %p71 = scmp.ne.s32.totalorder %s63, %s66
      %p72 = scmp.eq.s32.totalorder %s11, 0
      %p73 = por %p71, %p72
      %p74 = scmp.ne.s32.totalorder %s63, %s66
      %p75 = scmp.eq.s32.totalorder %s16, 1
      %p76 = por %p74, %p75
      %p77 = scmp.ne.s32.totalorder %s66, %s67
      %p78 = scmp.eq.s32.totalorder %s16, 0
      %p79 = por %p77, %p78
      %p80 = scmp.ne.s32.totalorder %s66, %s67
      %p81 = scmp.eq.s32.totalorder %s17, 1
      %p82 = por %p80, %p81
      %p84 = scmp.ne.s32.totalorder %s67, %s83
      %p85 = scmp.eq.s32.totalorder %s17, 0
      %p86 = por %p84, %p85
      %s87 = ssub.s32 %s11, %s18
      %p88 = scmp.eq.s32.totalorder %s87, 0
      %s90 = sadd.s32 %s89, 1
      %s91 = scalar_select %p88, %s89, %s90
      %p94 = pneg %p88
      %p95 = scmp.eq.s32.totalorder %s11, 1
      %p96 = por %p94, %p95
      %p97 = scmp.ne.s32.totalorder %s89, %s92
      %p98 = scmp.eq.s32.totalorder %s11, 0
      %p99 = por %p97, %p98
      %p100 = scmp.ne.s32.totalorder %s89, %s92
      %p101 = scmp.eq.s32.totalorder %s16, 1
      %p102 = por %p100, %p101
      %p103 = scmp.ne.s32.totalorder %s92, %s93
      %p104 = scmp.eq.s32.totalorder %s16, 0
      %p105 = por %p103, %p104
      %p106 = scmp.ne.s32.totalorder %s92, %s93
      %p107 = scmp.eq.s32.totalorder %s17, 1
      %p108 = por %p106, %p107
      %p110 = scmp.ne.s32.totalorder %s93, %s109
      %p111 = scmp.eq.s32.totalorder %s17, 0
      %p112 = por %p110, %p111
      %s113 = ssub.s32 %s11, %s18
      %p114 = scmp.eq.s32.totalorder %s113, 0
      %s116 = sadd.s32 %s115, 1
      %s117 = scalar_select %p114, %s115, %s116
      %p120 = pneg %p114
      %p121 = scmp.eq.s32.totalorder %s11, 1
      %p122 = por %p120, %p121
      %p123 = scmp.ne.s32.totalorder %s115, %s118
      %p124 = scmp.eq.s32.totalorder %s11, 0
      %p125 = por %p123, %p124
      %p126 = scmp.ne.s32.totalorder %s115, %s118
      %p127 = scmp.eq.s32.totalorder %s16, 1
      %p128 = por %p126, %p127
      %p129 = scmp.ne.s32.totalorder %s118, %s119
      %p130 = scmp.eq.s32.totalorder %s16, 0
      %p131 = por %p129, %p130
      %p132 = scmp.ne.s32.totalorder %s118, %s119
      %p133 = scmp.eq.s32.totalorder %s17, 1
      %p134 = por %p132, %p133
      %p136 = scmp.ne.s32.totalorder %s119, %s135
      %p137 = scmp.eq.s32.totalorder %s17, 0
      %p138 = por %p136, %p137
      %p139 = scmp.le.s32.totalorder 1, %s11
      %p140 = scmp.lt.s32.totalorder %s11, 3
      %p141 = pnand %p139, %p140
      %p142 = pneg %p141
      // Predicated region
      $region9: #{layer_module_forward.1} parent=5 // pred_check
        _
      $region10: #{layer_module_forward.1} parent=5 // pred_check_branch
        %144 = sbr.rel (%p141) target = $region12
      $region11: #{layer_module_forward.1} parent=5 // pred_region
        %s145 = ssub.s32 %s11, 1
        // Predicated region
        $region13: #{layer_module_forward.1} parent=11 // pred_check
          %p146 = pneg %p32
        $region14: #{layer_module_forward.1} parent=11 // pred_check_branch
          %148 = sbr.rel (%p146) target = $region16
        $region15: #{layer_module_forward.1} parent=11 // pred_region
          _
        $region16: #{layer_module_forward.1} parent=11 // pred_fallthru
          _
        // Predicated region
        $region17: #{layer_module_forward.1} parent=11 // pred_check
          %p149 = pneg %p53
        $region18: #{layer_module_forward.1} parent=11 // pred_check_branch
          %151 = sbr.rel (%p149) target = $region20
        $region19: #{layer_module_forward.1} parent=11 // pred_region
          _
        $region20: #{layer_module_forward.1} parent=11 // pred_fallthru
          _
      $region12: #{layer_module_forward.1} parent=5 // pred_fallthru
        _
      %p152 = scmp.lt.s32.totalorder %s11, 2
      // Predicated region
      $region21: #{layer_module_forward.1} parent=5 // pred_check
        %p153 = pneg %p152
      $region22: #{layer_module_forward.1} parent=5 // pred_check_branch
        %155 = sbr.rel (%p153) target = $region24
      $region23: #{layer_module_forward.1} parent=5 // pred_region
        // Predicated region
        $region25: #{layer_module_forward.1} parent=23 // pred_check
          %p156 = pneg %p73
        $region26: #{layer_module_forward.1} parent=23 // pred_check_branch
          %158 = sbr.rel (%p156) target = $region28
        $region27: #{layer_module_forward.1} parent=23 // pred_region
          %s159 = sand.u32 %s63, 1
          %s160 = sand.u32 %s63, 1
          %s161 = smul.addr %s160, 48
          %s162 = scalar_lea.vmem [#allocation2], %s161
          %s163 = smul.u32 2, %s11
          %s164 = smul.addr %s163, 8
          %s165 = scalar_lea.vmem %s2, %s164
          // Predicated region
          $region29: #{layer_module_forward.1} parent=27 // pred_check
            _
          $region30: #{layer_module_forward.1} parent=27 // pred_check_branch
            %167 = sbr.rel (0) target = $region32
          $region31: #{layer_module_forward.1} parent=27 // pred_region
            // Predicated region
            $region33: #{layer_module_forward.1} parent=31 // pred_check
              _
            $region34: #{layer_module_forward.1} parent=31 // pred_check_branch
              %169 = sbr.rel (0) target = $region36
            $region35: #{layer_module_forward.1} parent=31 // pred_region
              loop: start=0, step=1, limit=1
              $region37: #{layer_module_forward.1} parent=35 // loop_pre_header
                _
              $region38: #{layer_module_forward.1} parent=35 // loop_header
                %s171 = sphi 0, %s175
                %p172 = scmp.ge.s32.totalorder %s171, 1
                %s176 = sphi %s165, %s165
                %s177 = sphi %s162, %s162
              $region39: #{layer_module_forward.1} parent=35 // loop_header_branch
                %174 = sbr.rel (%p172) target = $region43
              $region40: #{layer_module_forward.1} parent=35 // loop_body
                %v178 = vld [vmem:[%s176] sm:$0xff]
                %179 = vst [vmem:[%s177] sm:$0xff] %v178
                %v180 = vld [vmem:[%s176 + $0x8] sm:$0xff]
                %181 = vst [vmem:[%s177 + $0x8] sm:$0xff] %v180
                %v182 = vld [vmem:[%s176 + $0x20] sm:$0xff]
                %183 = vst [vmem:[%s177 + $0x10] sm:$0xff] %v182
                %v184 = vld [vmem:[%s176 + $0x28] sm:$0xff]
                %185 = vst [vmem:[%s177 + $0x18] sm:$0xff] %v184
                %v186 = vld [vmem:[%s176 + $0x40] sm:$0xff]
                %187 = vst [vmem:[%s177 + $0x20] sm:$0xff] %v186
                %v188 = vld [vmem:[%s176 + $0x48] sm:$0xff]
                %189 = vst [vmem:[%s177 + $0x28] sm:$0xff] %v188
              $region41: #{layer_module_forward.1} parent=35 // loop_footer
                %s175 = sadd.s32 1, %s171
              $region42: #{layer_module_forward.1} parent=35 // loop_footer_branch
                %170 = sbr.rel target = $region38
              $region43: #{layer_module_forward.1} parent=35 // loop_exit
                _
            $region36: #{layer_module_forward.1} parent=31 // pred_fallthru
              _
            // Predicated region
            $region44: #{layer_module_forward.1} parent=31 // pred_check
              _
            $region45: #{layer_module_forward.1} parent=31 // pred_check_branch
              %191 = sbr.rel target = $region47
            $region46: #{layer_module_forward.1} parent=31 // pred_region
              _
            $region47: #{layer_module_forward.1} parent=31 // pred_fallthru
              _
          $region32: #{layer_module_forward.1} parent=27 // pred_fallthru
            _
          %192 = vnop
        $region28: #{layer_module_forward.1} parent=23 // pred_fallthru
          _
      $region24: #{layer_module_forward.1} parent=5 // pred_fallthru
        _
      %p193 = scmp.le.s32.totalorder 1, %s11
      %p194 = scmp.lt.s32.totalorder %s11, 3
      %p195 = pnand %p193, %p194
      %p196 = pneg %p195
      // Predicated region
      $region48: #{layer_module_forward.1} parent=5 // pred_check
        _
      $region49: #{layer_module_forward.1} parent=5 // pred_check_branch
        %198 = sbr.rel (%p195) target = $region51
      $region50: #{layer_module_forward.1} parent=5 // pred_region
        %s199 = ssub.s32 %s11, 1
        %s200 = sand.u32 %s66, 1
        %s201 = sand.u32 %s66, 1
        %s202 = smul.addr %s201, 48
        %s203 = scalar_lea.vmem [#allocation2], %s202
        // Predicated region
        $region52: #{layer_module_forward.1} parent=50 // pred_check
          %p204 = pneg %p79
        $region53: #{layer_module_forward.1} parent=50 // pred_check_branch
          %206 = sbr.rel (%p204) target = $region55
        $region54: #{layer_module_forward.1} parent=50 // pred_region
          _
        $region55: #{layer_module_forward.1} parent=50 // pred_fallthru
          _
        %p207 = pneg %p32
        %p208 = pneg %p29
        %p209 = pneg %p53
        %p210 = pneg %p50
        %s211 = sand.u32 %s66, 1
        %s212 = sand.u32 %s66, 1
        %s213 = smul.addr %s212, 48
        %s214 = scalar_lea.vmem [#allocation2], %s213
        %p215 = pneg %p79
        %p216 = pneg %p76
        %p217 = pneg %p105
        %p218 = pneg %p102
        %s219 = smul.u32 2, %s16
        %p220 = scmp.lt.s32.totalorder %s219, 3
        %s221 = scalar_select %p220, %s219, 3
        %s222 = smul.addr %s221, 8
        %s223 = scalar_lea.vmem %s3, %s222
        %p224 = pneg %p131
        %p225 = pneg %p128
        %s226 = smul.u32 2, %s16
        %p227 = scmp.lt.s32.totalorder %s226, 3
        %s228 = scalar_select %p227, %s226, 3
        %s229 = smul.addr %s228, 8
        %s230 = scalar_lea.vmem %s4, %s229
        %s231 = smul.u32 2, %s16
        %s232 = smul.u32 2, %s16
        %p233 = scmp.lt.s32.totalorder %s232, 3
        %s234 = scalar_select %p233, %s232, 3
        %s235 = smul.addr %s234, 8
        %s236 = scalar_lea.vmem %s3, %s235
        %s237 = smul.u32 2, %s16
        %s238 = smul.u32 2, %s16
        %p239 = scmp.lt.s32.totalorder %s238, 3
        %s240 = scalar_select %p239, %s238, 3
        %s241 = smul.addr %s240, 8
        %s242 = scalar_lea.vmem %s4, %s241
        %s243 = smul.u32 2, %s16
        %v244 = vld [vmem:[%s203] sm:$0xff]
        %v245 = vld [vmem:[%s203 + $0x8] sm:$0xff]
        %v246 = vld [vmem:[%s203 + $0x10] sm:$0xff]
        %v247 = vld [vmem:[%s203 + $0x18] sm:$0xff]
        %v248 = vld [vmem:[%s203 + $0x20] sm:$0xff]
        %v249 = vld [vmem:[%s203 + $0x28] sm:$0xff]
        %v250 = vld [vmem:[%s0] sm:$0xff]
        %vm251 = vcmask 195584
        %v253 = vsel %vm251, %v250, 0
        %255 = vmatprep.subr.mxu0 %v245
        %256 = vmatpush1.msra.mxu0 %v244
        %257 = vmatprep.subr.mxu0 %v247
        %258 = vmatpush1.msra.mxu0 %v246
        %259 = vmatprep.subr.mxu0 %v249
        %260 = vmatpush1.msra.mxu0 %v248
        %261 = vmatprep.subr.mxu0 0.0
        %262 = vmatpush1.msra.mxu0 0.0
        %263 = vmatprep.subr.mxu0 0.0
        %264 = vmatpush1.msra.mxu0 0.0
        %265 = vmatprep.subr.mxu0 0.0
        %266 = vmatpush1.msra.mxu0 0.0
        %267 = vmatprep.subr.mxu0 0.0
        %268 = vmatpush1.msra.mxu0 0.0
        %269 = vmatprep.subr.mxu0 0.0
        %270 = vmatpush1.msra.mxu0 0.0
        %271 = vmatprep.subr.mxu0 0.0
        %272 = vmatpush1.msra.mxu0 0.0
        %273 = vmatprep.subr.mxu0 0.0
        %274 = vmatpush1.msra.mxu0 0.0
        %275 = vmatprep.subr.mxu0 0.0
        %276 = vmatpush1.msra.mxu0 0.0
        %277 = vmatprep.subr.mxu0 0.0
        %278 = vmatpush1.msra.mxu0 0.0
        %279 = vmatprep.subr.mxu0 0.0
        %280 = vmatpush1.msra.mxu0 0.0
        %281 = vmatprep.subr.mxu0 0.0
        %282 = vmatpush1.msra.mxu0 0.0
        %283 = vmatprep.subr.mxu0 0.0
        %284 = vmatpush1.msra.mxu0 0.0
        %285 = vmatprep.subr.mxu0 0.0
        %286 = vmatpush1.msra.mxu0 0.0
        %287 = vmatprep.subr.mxu0 0.0
        %288 = vmatpush1.msra.mxu0 0.0
        %289 = vmatprep.subr.mxu0 0.0
        %290 = vmatpush1.msra.mxu0 0.0
        %291 = vmatprep.subr.mxu0 0.0
        %292 = vmatpush1.msra.mxu0 0.0
        %293 = vmatprep.subr.mxu0 0.0
        %294 = vmatpush1.msra.mxu0 0.0
        %295 = vmatprep.subr.mxu0 0.0
        %296 = vmatpush1.msra.mxu0 0.0
        %297 = vmatprep.subr.mxu0 0.0
        %298 = vmatpush1.msra.mxu0 0.0
        %299 = vmatprep.subr.mxu0 0.0
        %300 = vmatpush1.msra.mxu0 0.0
        %301 = vmatprep.subr.mxu0 0.0
        %302 = vmatpush1.msra.mxu0 0.0
        %303 = vmatprep.subr.mxu0 0.0
        %304 = vmatpush1.msra.mxu0 0.0
        %305 = vmatprep.subr.mxu0 0.0
        %306 = vmatpush1.msra.mxu0 0.0
        %307 = vmatprep.subr.mxu0 0.0
        %308 = vmatpush1.msra.mxu0 0.0
        %309 = vmatprep.subr.mxu0 0.0
        %310 = vmatpush1.msra.mxu0 0.0
        %311 = vmatprep.subr.mxu0 0.0
        %312 = vmatpush1.msra.mxu0 0.0
        %313 = vmatprep.subr.mxu0 0.0
        %314 = vmatpush1.msra.mxu0 0.0
        %315 = vmatprep.subr.mxu0 0.0
        %316 = vmatpush1.msra.mxu0 0.0
        %317 = vmatprep.subr.mxu0 0.0
        %318 = vmatpush1.msra.mxu0 0.0
        %319 = vmatprep.mubr.f32.mxu0 0.0
        %320 = vmatmul.mubr.f32.gmra.mrb[0].mxu0 %v253
        %v321 = vpop.f32.mrb[0].mxu0
        %v322 = vadd.f32 0.0, %v321
        %v323 = vpop.f32.mrb[0].mxu0
        %v324 = vadd.f32 0.0, %v323
        %325 = vdwg.mxu0
        %326 = vst [vmem:[%s236] sm:$0xff] %v322
        %327 = vst [vmem:[%s236 + $0x8] sm:$0xff] %v324
        %v328 = vld [vmem:[%s1] sm:$0xff]
        %v330 = vsel %vm251, %v328, 0
        %332 = vmatprep.subr.mxu0 %v245
        %333 = vmatpush1.msra.mxu0 %v244
        %334 = vmatprep.subr.mxu0 %v247
        %335 = vmatpush1.msra.mxu0 %v246
        %336 = vmatprep.subr.mxu0 %v249
        %337 = vmatpush1.msra.mxu0 %v248
        %338 = vmatprep.subr.mxu0 0.0
        %339 = vmatpush1.msra.mxu0 0.0
        %340 = vmatprep.subr.mxu0 0.0
        %341 = vmatpush1.msra.mxu0 0.0
        %342 = vmatprep.subr.mxu0 0.0
        %343 = vmatpush1.msra.mxu0 0.0
        %344 = vmatprep.subr.mxu0 0.0
        %345 = vmatpush1.msra.mxu0 0.0
        %346 = vmatprep.subr.mxu0 0.0
        %347 = vmatpush1.msra.mxu0 0.0
        %348 = vmatprep.subr.mxu0 0.0
        %349 = vmatpush1.msra.mxu0 0.0
        %350 = vmatprep.subr.mxu0 0.0
        %351 = vmatpush1.msra.mxu0 0.0
        %352 = vmatprep.subr.mxu0 0.0
        %353 = vmatpush1.msra.mxu0 0.0
        %354 = vmatprep.subr.mxu0 0.0
        %355 = vmatpush1.msra.mxu0 0.0
        %356 = vmatprep.subr.mxu0 0.0
        %357 = vmatpush1.msra.mxu0 0.0
        %358 = vmatprep.subr.mxu0 0.0
        %359 = vmatpush1.msra.mxu0 0.0
        %360 = vmatprep.subr.mxu0 0.0
        %361 = vmatpush1.msra.mxu0 0.0
        %362 = vmatprep.subr.mxu0 0.0
        %363 = vmatpush1.msra.mxu0 0.0
        %364 = vmatprep.subr.mxu0 0.0
        %365 = vmatpush1.msra.mxu0 0.0
        %366 = vmatprep.subr.mxu0 0.0
        %367 = vmatpush1.msra.mxu0 0.0
        %368 = vmatprep.subr.mxu0 0.0
        %369 = vmatpush1.msra.mxu0 0.0
        %370 = vmatprep.subr.mxu0 0.0
        %371 = vmatpush1.msra.mxu0 0.0
        %372 = vmatprep.subr.mxu0 0.0
        %373 = vmatpush1.msra.mxu0 0.0
        %374 = vmatprep.subr.mxu0 0.0
        %375 = vmatpush1.msra.mxu0 0.0
        %376 = vmatprep.subr.mxu0 0.0
        %377 = vmatpush1.msra.mxu0 0.0
        %378 = vmatprep.subr.mxu0 0.0
        %379 = vmatpush1.msra.mxu0 0.0
        %380 = vmatprep.subr.mxu0 0.0
        %381 = vmatpush1.msra.mxu0 0.0
        %382 = vmatprep.subr.mxu0 0.0
        %383 = vmatpush1.msra.mxu0 0.0
        %384 = vmatprep.subr.mxu0 0.0
        %385 = vmatpush1.msra.mxu0 0.0
        %386 = vmatprep.subr.mxu0 0.0
        %387 = vmatpush1.msra.mxu0 0.0
        %388 = vmatprep.subr.mxu0 0.0
        %389 = vmatpush1.msra.mxu0 0.0
        %390 = vmatprep.subr.mxu0 0.0
        %391 = vmatpush1.msra.mxu0 0.0
        %392 = vmatprep.subr.mxu0 0.0
        %393 = vmatpush1.msra.mxu0 0.0
        %394 = vmatprep.subr.mxu0 0.0
        %395 = vmatpush1.msra.mxu0 0.0
        %396 = vmatprep.mubr.f32.mxu0 0.0
        %397 = vmatmul.mubr.f32.gmra.mrb[0].mxu0 %v330
        %v398 = vpop.f32.mrb[0].mxu0
        %v399 = vadd.f32 0.0, %v398
        %v400 = vpop.f32.mrb[0].mxu0
        %v401 = vadd.f32 0.0, %v400
        %402 = vdwg.mxu0
        %403 = vst [vmem:[%s242] sm:$0xff] %v399
        %404 = vst [vmem:[%s242 + $0x8] sm:$0xff] %v401
        %s405 = smul.u32 2, %s16
        %p406 = scmp.lt.s32.totalorder %s405, 3
        %s407 = scalar_select %p406, %s405, 3
        %s408 = smul.addr %s407, 8
        %s409 = scalar_lea.vmem %s3, %s408
        %s410 = smul.u32 2, %s16
        %p411 = scmp.lt.s32.totalorder %s410, 3
        %s412 = scalar_select %p411, %s410, 3
        %s413 = smul.addr %s412, 8
        %s414 = scalar_lea.vmem %s4, %s413
        // Predicated region
        $region56: #{layer_module_forward.1} parent=50 // pred_check
          %p415 = pneg %p102
        $region57: #{layer_module_forward.1} parent=50 // pred_check_branch
          %417 = sbr.rel (%p415) target = $region59
        $region58: #{layer_module_forward.1} parent=50 // pred_region
          %s418 = smul.u32 2, %s16
        $region59: #{layer_module_forward.1} parent=50 // pred_fallthru
          _
        // Predicated region
        $region60: #{layer_module_forward.1} parent=50 // pred_check
          %p419 = pneg %p128
        $region61: #{layer_module_forward.1} parent=50 // pred_check_branch
          %421 = sbr.rel (%p419) target = $region63
        $region62: #{layer_module_forward.1} parent=50 // pred_region
          %s422 = smul.u32 2, %s16
        $region63: #{layer_module_forward.1} parent=50 // pred_fallthru
          _
      $region51: #{layer_module_forward.1} parent=5 // pred_fallthru
        _
      %p423 = scmp.le.s32.totalorder 2, %s11
      // Predicated region
      $region64: #{layer_module_forward.1} parent=5 // pred_check
        %p424 = pneg %p423
      $region65: #{layer_module_forward.1} parent=5 // pred_check_branch
        %426 = sbr.rel (%p424) target = $region67
      $region66: #{layer_module_forward.1} parent=5 // pred_region
        %s427 = ssub.s32 %s11, 2
        // Predicated region
        $region68: #{layer_module_forward.1} parent=66 // pred_check
          %p428 = pneg %p108
        $region69: #{layer_module_forward.1} parent=66 // pred_check_branch
          %430 = sbr.rel (%p428) target = $region71
        $region70: #{layer_module_forward.1} parent=66 // pred_region
          %s431 = smul.u32 2, %s17
          %p432 = scmp.lt.s32.totalorder %s431, 3
          %s433 = scalar_select %p432, %s431, 3
          %s434 = smul.addr %s433, 8
          %s435 = scalar_lea.vmem %s3, %s434
        $region71: #{layer_module_forward.1} parent=66 // pred_fallthru
          _
        // Predicated region
        $region72: #{layer_module_forward.1} parent=66 // pred_check
          %p436 = pneg %p134
        $region73: #{layer_module_forward.1} parent=66 // pred_check_branch
          %438 = sbr.rel (%p436) target = $region75
        $region74: #{layer_module_forward.1} parent=66 // pred_region
          %s439 = smul.u32 2, %s17
          %p440 = scmp.lt.s32.totalorder %s439, 3
          %s441 = scalar_select %p440, %s439, 3
          %s442 = smul.addr %s441, 8
          %s443 = scalar_lea.vmem %s4, %s442
        $region75: #{layer_module_forward.1} parent=66 // pred_fallthru
          _
      $region67: #{layer_module_forward.1} parent=5 // pred_fallthru
        _
    $region6: #{layer_module_forward.1} parent=1 // loop_footer
      %s15 = sadd.s32 1, %s11
    $region7: #{layer_module_forward.1} parent=1 // loop_footer_branch
      %10 = sbr.rel target = $region3
    $region8: #{layer_module_forward.1} parent=1 // loop_exit
      _

</llo_original>
